<compile_context>
chip_gen: v5e
topology: v5e:2x2
jax: 0.10.0
libtpu: 0.0.40
codegen_flags: <defaults>
</compile_context>

<pallas_src>
from functools import partial

import jax
import jax.numpy as jnp
from jax.experimental import pallas as pl
from jax.experimental.pallas import tpu as pltpu


def _round_up(x, m):
    return (x + m - 1) // m * m


def energy_net_kernel(xT_ref, w1_ref, b1_ref, w2_ref, b2_ref, w3_ref, b3_ref,
                      o_ref, *, layer1_on_mxu):
    """Fused 3-layer MLP forward for one batch tile (transposed layout).

    xT_ref: (D, TB)    input tile, batch on lanes
    w1_ref: (H, D)     b1_ref: (H, 1)
    w2_ref: (H, H)     b2_ref: (H, 1)   (w1/w2 may be bf16; accumulation is f32)
    w3_ref: (H, 1)     b3_ref: (1, 1)   (SMEM scalar)
    o_ref : (1, TB)    lane-dense output tile
    """
    b1 = b1_ref[...].astype(jnp.float32)                       # (H, 1)

    # ---- Layer 1: Linear(D -> H) + ReLU.
    if layer1_on_mxu:
        # MXU path (enable on v6e/v7x only if a bundle dump shows VALU-bound
        # with MXU idle): wasting MXU K-depth is free when it isn't binding.
        h1 = jnp.dot(w1_ref[...], xT_ref[...].astype(w1_ref.dtype),
                     preferred_element_type=jnp.float32) + b1  # (H, TB)
    else:
        # VPU path: K=D is tiny, a matmul would pad the contraction to full
        # MXU depth.  b1 is folded into the accumulator init.
        xT = xT_ref[...].astype(jnp.float32)                   # (D, TB)
        w1 = w1_ref[...].astype(jnp.float32)                   # (H, D)
        D = w1.shape[1]
        h1 = b1 + w1[:, 0:1] * xT[0:1, :]
        for d in range(1, D):
            h1 = h1 + w1[:, d:d + 1] * xT[d:d + 1, :]
    h1 = jnp.maximum(h1, 0.0)                                   # (H, TB)

    # ---- Layer 2: Linear(H -> H) + ReLU on the MXU: (H,H) @ (H,TB).
    # h1 cast to the weight dtype (bf16 by default) before the push: native
    # MXU input everywhere and halves h1 spill stores on v5e's single vst slot.
    h2 = jnp.dot(w2_ref[...], h1.astype(w2_ref.dtype),
                 preferred_element_type=jnp.float32)
    h2 = jnp.maximum(h2 + b2_ref[...].astype(jnp.float32), 0.0)  # (H, TB)

    # ---- Layer 3: Linear(H -> 1) as VPU multiply + sublane reduction
    # (an N=1 MXU matmul would use 1 of 128/256 output columns).
    out_row = jnp.sum(w3_ref[...].astype(jnp.float32) * h2, axis=0,
                      keepdims=True) + b3_ref[0, 0]             # (1, TB)
    o_ref[...] = out_row.astype(o_ref.dtype)


def energy_net_forward(x, params, *, tile_b=None, use_bf16_matmul=True,
                       layer1_on_mxu=False):
    """EnergyNet forward: x (B, D) -> (B, 1).

    params (PyTorch layout): w1 (H,D), b1 (H,), w2 (H,H), b2 (H,), w3 (1,H), b3 (1,)
    """
    B, D = x.shape
    w1 = params["w1"]
    b1 = params["b1"].reshape(-1, 1)
    w2 = params["w2"]
    b2 = params["b2"].reshape(-1, 1)
    w3 = params["w3"].reshape(-1, 1)          # (1,H) -> (H,1) column
    b3 = params["b3"].reshape(1, 1).astype(jnp.float32)
    H = w1.shape[0]

    if use_bf16_matmul:
        # bf16 is the native MXU input on v5e/v6e/v7x; accumulation stays f32.
        w2 = w2.astype(jnp.bfloat16)
        if layer1_on_mxu:
            w1 = w1.astype(jnp.bfloat16)

    # ---- Batch-tile selection (VMEM-aware; per-step overhead ~0.35us).
    # At tile_b=4096 the footprint is ~5 MiB (x tile + resident weights +
    # h1/h2 temporaries), far below the 32 MiB scoped default and v7x's
    # 64 MiB physical VMEM.  When there is enough work, keep >= 2 grid steps
    # so the "parallel" axis can shard across v7x's two TensorCores.
    b_ceil = _round_up(B, 128)
    if tile_b is None:
        tile_b = min(4096, b_ceil)
        if b_ceil >= 512:
            tile_b = min(tile_b, _round_up(pl.cdiv(b_ceil, 2), 256))
    tile_b = max(128, _round_up(tile_b, 128))
    num_tiles = pl.cdiv(B, tile_b)

    # Batch on lanes, features on sublanes.  No HBM pad: the ragged last tile
    # is handled by Pallas block masking and the masked output write.
    xT = x.T                                                    # (D, B)

    flops = 2 * B * (D * H + H * H + H)
    bytes_accessed = (x.size * x.dtype.itemsize + 4 * B
                      + w1.size * w1.dtype.itemsize
                      + w2.size * w2.dtype.itemsize
                      + 4 * (3 * H + 1))
    cost = pl.CostEstimate(flops=flops, transcendentals=0,
                           bytes_accessed=int(bytes_accessed))

    const2 = lambda i: (0, 0)

    out = pl.pallas_call(
        partial(energy_net_kernel, layer1_on_mxu=layer1_on_mxu),
        out_shape=jax.ShapeDtypeStruct((1, B), jnp.float32),
        grid=(num_tiles,),
        in_specs=[
            pl.BlockSpec((D, tile_b), lambda i: (0, i)),        # x tile (lanes = batch)
            pl.BlockSpec((H, D), const2),                       # w1 (resident)
            pl.BlockSpec((H, 1), const2),                       # b1
            pl.BlockSpec((H, H), const2),                       # w2
            pl.BlockSpec((H, 1), const2),                       # b2
            pl.BlockSpec((H, 1), const2),                       # w3
            pl.BlockSpec(memory_space=pltpu.MemorySpace.SMEM),  # b3 scalar
        ],
        out_specs=pl.BlockSpec((1, tile_b), lambda i: (0, i)),  # lane-dense rows
        compiler_params=pltpu.CompilerParams(
            dimension_semantics=("parallel",)),
        cost_estimate=cost,
    )(xT, w1, b1, w2, b2, w3, b3)

    return out.reshape(B, 1)        # (1,B) -> (B,1) is metadata-only


def init_params(key, input_dim=2, hidden_dim=128):
    """Deterministic PyTorch-style (Kaiming-uniform-ish) init, (out,in) layout."""
    ks = jax.random.split(key, 6)

    def lin_init(kw, kb, fan_in, fan_out):
        bound = 1.0 / jnp.sqrt(fan_in)
        w = jax.random.uniform(kw, (fan_out, fan_in), jnp.float32,
                               minval=-bound, maxval=bound)
        b = jax.random.uniform(kb, (fan_out,), jnp.float32,
                               minval=-bound, maxval=bound)
        return w, b

    w1, b1 = lin_init(ks[0], ks[1], input_dim, hidden_dim)
    w2, b2 = lin_init(ks[2], ks[3], hidden_dim, hidden_dim)
    w3, b3 = lin_init(ks[4], ks[5], hidden_dim, 1)
    return dict(w1=w1, b1=b1, w2=w2, b2=b2, w3=w3, b3=b3)


def reference_forward(x, p):
    h1 = jnp.maximum(x @ p["w1"].T + p["b1"], 0.0)
    h2 = jnp.maximum(h1 @ p["w2"].T + p["b2"], 0.0)
    return h2 @ p["w3"].T + p["b3"]


if __name__ == "__main__":
    key = jax.random.PRNGKey(0)
    kx, kp = jax.random.split(key)

    batch, input_dim, hidden_dim = 200, 2, 128   # ragged batch exercises masking
    x = jax.random.normal(kx, (batch, input_dim), dtype=jnp.float32)
    params = init_params(kp, input_dim=input_dim, hidden_dim=hidden_dim)
    ref = reference_forward(x, params)

    # Strict-precision path: f32 MXU, forced 2-step ragged grid.
    out_f32 = jax.block_until_ready(
        energy_net_forward(x, params, tile_b=128, use_bf16_matmul=False))
    assert out_f32.shape == (batch, 1)
    assert jnp.allclose(out_f32, ref, atol=3e-5, rtol=3e-5), "f32 mismatch vs reference"

    # Default fast path: bf16 MXU inputs (f32 accumulation), auto tile selection.
    out_fast = jax.block_until_ready(energy_net_forward(x, params))
    assert out_fast.shape == (batch, 1)
    assert jnp.allclose(out_fast, ref, atol=5e-2, rtol=5e-2), "bf16 mismatch vs reference"

    print("KERNEL_OK")
</pallas_src>

<mosaic_0001>
module attributes {stable_mosaic.version = 11 : i64} {
  func.func @energy_net_kernel(%arg0: i32, %arg1: memref<2x128xf32, #tpu.memory_space<vmem>>, %arg2: memref<128x2xf32, #tpu.memory_space<vmem>>, %arg3: memref<128x1xf32, #tpu.memory_space<vmem>>, %arg4: memref<128x128xf32, #tpu.memory_space<vmem>>, %arg5: memref<128x1xf32, #tpu.memory_space<vmem>>, %arg6: memref<128x1xf32, #tpu.memory_space<vmem>>, %arg7: memref<1x1xf32, #tpu.memory_space<smem>>, %arg8: memref<1x128xf32, #tpu.memory_space<vmem>>) attributes {dimension_semantics = [#tpu.dimension_semantics<parallel>], iteration_bounds = array<i64: 2>, scalar_prefetch = 0 : i64, scratch_operands = 0 : i64, tpu.core_type = #tpu.core_type<tc>, window_params = [{transform_indices = @transform_0, window_bounds = array<i64: 2, 128>}, {pipeline_mode = #tpu.pipeline_mode<synchronous>, transform_indices = @transform_1, window_bounds = array<i64: 128, 2>}, {pipeline_mode = #tpu.pipeline_mode<synchronous>, transform_indices = @transform_2, window_bounds = array<i64: 128, 1>}, {pipeline_mode = #tpu.pipeline_mode<synchronous>, transform_indices = @transform_3, window_bounds = array<i64: 128, 128>}, {pipeline_mode = #tpu.pipeline_mode<synchronous>, transform_indices = @transform_4, window_bounds = array<i64: 128, 1>}, {pipeline_mode = #tpu.pipeline_mode<synchronous>, transform_indices = @transform_5, window_bounds = array<i64: 128, 1>}, {transform_indices = @transform_6, window_bounds = array<i64: 1, 1>}, {transform_indices = @transform_7, window_bounds = array<i64: 1, 128>}]} {
    %c0 = arith.constant 0 : index
    %c0_0 = arith.constant 0 : index
    %0 = vector.load %arg3[%c0, %c0_0] : memref<128x1xf32, #tpu.memory_space<vmem>>, vector<128x1xf32>
    %c0_1 = arith.constant 0 : index
    %c0_2 = arith.constant 0 : index
    %1 = vector.load %arg1[%c0_1, %c0_2] : memref<2x128xf32, #tpu.memory_space<vmem>>, vector<2x128xf32>
    %c0_3 = arith.constant 0 : index
    %c0_4 = arith.constant 0 : index
    %2 = vector.load %arg2[%c0_3, %c0_4] : memref<128x2xf32, #tpu.memory_space<vmem>>, vector<128x2xf32>
    %3 = vector.extract_strided_slice %2 {offsets = [0, 0], sizes = [128, 1], strides = [1, 1]} : vector<128x2xf32> to vector<128x1xf32>
    %4 = vector.extract_strided_slice %1 {offsets = [0, 0], sizes = [1, 128], strides = [1, 1]} : vector<2x128xf32> to vector<1x128xf32>
    %5 = vector.broadcast %3 : vector<128x1xf32> to vector<128x128xf32>
    %6 = vector.broadcast %4 : vector<1x128xf32> to vector<128x128xf32>
    %7 = arith.mulf %5, %6 : vector<128x128xf32>
    %8 = vector.broadcast %0 : vector<128x1xf32> to vector<128x128xf32>
    %9 = arith.addf %8, %7 : vector<128x128xf32>
    %10 = vector.extract_strided_slice %2 {offsets = [0, 1], sizes = [128, 1], strides = [1, 1]} : vector<128x2xf32> to vector<128x1xf32>
    %11 = vector.extract_strided_slice %1 {offsets = [1, 0], sizes = [1, 128], strides = [1, 1]} : vector<2x128xf32> to vector<1x128xf32>
    %12 = vector.broadcast %10 : vector<128x1xf32> to vector<128x128xf32>
    %13 = vector.broadcast %11 : vector<1x128xf32> to vector<128x128xf32>
    %14 = arith.mulf %12, %13 : vector<128x128xf32>
    %15 = arith.addf %9, %14 : vector<128x128xf32>
    %cst = arith.constant 0.000000e+00 : f32
    %16 = vector.broadcast %cst : f32 to vector<128x128xf32>
    %17 = arith.maximumf %15, %16 : vector<128x128xf32>
    %c0_5 = arith.constant 0 : index
    %c0_6 = arith.constant 0 : index
    %18 = vector.load %arg4[%c0_5, %c0_6] : memref<128x128xf32, #tpu.memory_space<vmem>>, vector<128x128xf32>
    %cst_7 = arith.constant dense<0.000000e+00> : vector<128x128xf32>
    %19 = tpu.matmul %18, %17, %cst_7 {dimension_numbers = #tpu.dot_dimension_numbers<[1], [0], [0], [1], [0, 0, 1, 1], [], []>} : vector<128x128xf32>, vector<128x128xf32>, vector<128x128xf32> -> vector<128x128xf32>
    %c0_8 = arith.constant 0 : index
    %c0_9 = arith.constant 0 : index
    %20 = vector.load %arg5[%c0_8, %c0_9] : memref<128x1xf32, #tpu.memory_space<vmem>>, vector<128x1xf32>
    %21 = vector.broadcast %20 : vector<128x1xf32> to vector<128x128xf32>
    %22 = arith.addf %19, %21 : vector<128x128xf32>
    %cst_10 = arith.constant 0.000000e+00 : f32
    %23 = vector.broadcast %cst_10 : f32 to vector<128x128xf32>
    %24 = arith.maximumf %22, %23 : vector<128x128xf32>
    %c0_11 = arith.constant 0 : index
    %c0_12 = arith.constant 0 : index
    %25 = vector.load %arg6[%c0_11, %c0_12] : memref<128x1xf32, #tpu.memory_space<vmem>>, vector<128x1xf32>
    %26 = vector.broadcast %25 : vector<128x1xf32> to vector<128x128xf32>
    %27 = arith.mulf %26, %24 : vector<128x128xf32>
    %cst_13 = arith.constant dense<0.000000e+00> : vector<128xf32>
    %28 = vector.multi_reduction <add>, %27, %cst_13 [0] : vector<128x128xf32> to vector<128xf32>
    %29 = vector.shape_cast %28 : vector<128xf32> to vector<1x128xf32>
    %c0_14 = arith.constant 0 : index
    %c0_15 = arith.constant 0 : index
    %30 = memref.load %arg7[%c0_14, %c0_15] : memref<1x1xf32, #tpu.memory_space<smem>>
    %31 = vector.broadcast %30 : f32 to vector<1x128xf32>
    %32 = arith.addf %29, %31 : vector<1x128xf32>
    %c0_16 = arith.constant 0 : index
    %c0_17 = arith.constant 0 : index
    %33 = vector.load %arg8[%c0_16, %c0_17] : memref<1x128xf32, #tpu.memory_space<vmem>>, vector<1x128xf32>
    tpu.vector_store %arg8[%c0_16, %c0_17], %32 {strides = array<i32>} : memref<1x128xf32, #tpu.memory_space<vmem>>, vector<1x128xf32>,
    return
  }
  func.func @transform_0(%arg0: i32) -> (i32, i32) {
    %c0_i32 = arith.constant 0 : i32
    %c0_i32_0 = arith.constant 0 : i32
    return %c0_i32, %arg0 : i32, i32
  }
  func.func @transform_1(%arg0: i32) -> (i32, i32) {
    %c0_i32 = arith.constant 0 : i32
    %c0_i32_0 = arith.constant 0 : i32
    %c0_i32_1 = arith.constant 0 : i32
    return %c0_i32, %c0_i32_0 : i32, i32
  }
  func.func @transform_2(%arg0: i32) -> (i32, i32) {
    %c0_i32 = arith.constant 0 : i32
    %c0_i32_0 = arith.constant 0 : i32
    %c0_i32_1 = arith.constant 0 : i32
    return %c0_i32, %c0_i32_0 : i32, i32
  }
  func.func @transform_3(%arg0: i32) -> (i32, i32) {
    %c0_i32 = arith.constant 0 : i32
    %c0_i32_0 = arith.constant 0 : i32
    %c0_i32_1 = arith.constant 0 : i32
    return %c0_i32, %c0_i32_0 : i32, i32
  }
  func.func @transform_4(%arg0: i32) -> (i32, i32) {
    %c0_i32 = arith.constant 0 : i32
    %c0_i32_0 = arith.constant 0 : i32
    %c0_i32_1 = arith.constant 0 : i32
    return %c0_i32, %c0_i32_0 : i32, i32
  }
  func.func @transform_5(%arg0: i32) -> (i32, i32) {
    %c0_i32 = arith.constant 0 : i32
    %c0_i32_0 = arith.constant 0 : i32
    %c0_i32_1 = arith.constant 0 : i32
    return %c0_i32, %c0_i32_0 : i32, i32
  }
  func.func @transform_6(%arg0: i32) -> (i32, i32) {
    %c0_i32 = arith.constant 0 : i32
    %c0_i32_0 = arith.constant 0 : i32
    %c0_i32_1 = arith.constant 0 : i32
    return %c0_i32, %c0_i32_0 : i32, i32
  }
  func.func @transform_7(%arg0: i32) -> (i32, i32) {
    %c0_i32 = arith.constant 0 : i32
    %c0_i32_0 = arith.constant 0 : i32
    return %c0_i32, %arg0 : i32, i32
  }
}

</mosaic_0001>

<llo_original>
// kernel: tpu_custom_call.1
$region0: #{tpu_custom_call.1}
  #allocation0 [shape = 'u32[]', space=smem, size = 0x4, offset = 0x4, fixed_abs, tag = 'smem constant byte address 0x4 - core index']
  #allocation1 [shape = 'u32[72,128]{1,0:T(1,128)}', space=vmem, size = 0x9000, scoped, tag = 'internal scratch']
  #allocation2 [shape = 'f32[1,1]{1,0:T(1,128)S(6)}', space=smem, size = 0x200, scoped, tag = 'scoped memory for tpu_custom_call.1']
  %s0 = inlined_call_operand.vmem [shape: f32[2,200], index: 0, kind: input, shape index: {}]
  %s1 = inlined_call_operand.vmem [shape: f32[128,2], index: 1, kind: input, shape index: {}]
  %s2 = inlined_call_operand.vmem [shape: f32[128,1], index: 2, kind: input, shape index: {}]
  %s3 = inlined_call_operand.vmem [shape: f32[128,128], index: 3, kind: input, shape index: {}]
  %s4 = inlined_call_operand.vmem [shape: f32[128,1], index: 4, kind: input, shape index: {}]
  %s5 = inlined_call_operand.vmem [shape: f32[128,1], index: 5, kind: input, shape index: {}]
  %s6 = inlined_call_operand.<no memory space> [shape: f32[1,1], index: 6, kind: input, shape index: {}]
  %s7 = inlined_call_operand.hbm [shape: f32[1,200], index: 7, kind: output, shape index: {}]
  %s8 = sld [smem:[#allocation0]]
  $region61: #{tpu_custom_call.1} parent=0
    _
  %s10 = ssub.s32 1, %s8
  %s11 = scalar_select 0, %s10, %s8
  %12 = sst [smem:[#allocation2]] %s6
  $region1: #{tpu_custom_call.1} parent=0
    #allocation3 [shape = 'u8[1024]{0}', space=vmem, size = 0x400, scoped, tag = 'output window, operand 0']
    #allocation4 [shape = 's32[2]{0}', space=sflag, size = 0x8, scoped, tag = 'scoped memory for tpu_custom_call.1']
    %13 = vsyncpa [#allocation4], 0
    %s14 = scalar_lea.sflag [#allocation4], 1
    %15 = vsyncpa %s14, 0
    loop: start=0, step=1, limit=4
    $region2: #{tpu_custom_call.1} parent=1 // loop_pre_header
      _
    $region3: #{tpu_custom_call.1} parent=1 // loop_header
      %s17 = sphi 0, %s21
      %p18 = scmp.ge.s32.totalorder %s17, 4
      %s27 = sphi 0, %s29
      %s30 = sphi 0, %s27
      %s31 = sphi 0, %s30
      %s47 = sphi 0, %s31
      %s51 = sphi 0, %s51
      %s53 = sphi 0, %s51
      %s54 = sphi 0, %s53
      %s68 = sphi 0, %s54
      %s72 = sphi 0, %s72
      %s74 = sphi 0, %s72
      %s75 = sphi 0, %s74
      %s89 = sphi 0, %s75
      %s93 = sphi 0, %s93
      %s95 = sphi 0, %s93
      %s96 = sphi 0, %s95
      %s110 = sphi 0, %s96
      %s114 = sphi 0, %s114
      %s116 = sphi 0, %s114
      %s117 = sphi 0, %s116
      %s131 = sphi 0, %s117
      %s135 = sphi 0, %s135
      %s137 = sphi 0, %s135
      %s138 = sphi 0, %s137
      %s152 = sphi 0, %s138
      %s156 = sphi 0, %s156
      %s158 = sphi 0, %s156
      %s159 = sphi 0, %s158
      %s173 = sphi 0, %s159
      %s179 = sphi 0, %s181
      %s182 = sphi 0, %s179
      %s183 = sphi 0, %s182
      %s199 = sphi 0, %s183
    $region4: #{tpu_custom_call.1} parent=1 // loop_header_branch
      %20 = sbr.rel (%p18) target = $region8
    $region5: #{tpu_custom_call.1} parent=1 // loop_body
      %s22 = ssub.s32 %s17, 1
      %s23 = ssub.s32 %s17, 2
      %s24 = sadd.s32 %s17, 1
      %s25 = ssub.s32 %s17, %s24
      %p26 = scmp.eq.s32.totalorder %s25, 0
      %s28 = sadd.s32 %s27, 1
      %s29 = scalar_select %p26, %s27, %s28
      %p32 = pneg %p26
      %p33 = scmp.eq.s32.totalorder %s17, 1
      %p34 = por %p32, %p33
      %p35 = scmp.ne.s32.totalorder %s27, %s30
      %p36 = scmp.eq.s32.totalorder %s17, 0
      %p37 = por %p35, %p36
      %p38 = scmp.ne.s32.totalorder %s27, %s30
      %p39 = scmp.eq.s32.totalorder %s22, 1
      %p40 = por %p38, %p39
      %p41 = scmp.ne.s32.totalorder %s30, %s31
      %p42 = scmp.eq.s32.totalorder %s22, 0
      %p43 = por %p41, %p42
      %p44 = scmp.ne.s32.totalorder %s30, %s31
      %p45 = scmp.eq.s32.totalorder %s23, 1
      %p46 = por %p44, %p45
      %p48 = scmp.ne.s32.totalorder %s31, %s47
      %p49 = scmp.eq.s32.totalorder %s23, 0
      %p50 = por %p48, %p49
      %s52 = sadd.s32 %s51, 1
      %p55 = scmp.eq.s32.totalorder %s17, 1
      %p56 = scmp.ne.s32.totalorder %s51, %s53
      %p57 = scmp.eq.s32.totalorder %s17, 0
      %p58 = por %p56, %p57
      %p59 = scmp.ne.s32.totalorder %s51, %s53
      %p60 = scmp.eq.s32.totalorder %s22, 1
      %p61 = por %p59, %p60
      %p62 = scmp.ne.s32.totalorder %s53, %s54
      %p63 = scmp.eq.s32.totalorder %s22, 0
      %p64 = por %p62, %p63
      %p65 = scmp.ne.s32.totalorder %s53, %s54
      %p66 = scmp.eq.s32.totalorder %s23, 1
      %p67 = por %p65, %p66
      %p69 = scmp.ne.s32.totalorder %s54, %s68
      %p70 = scmp.eq.s32.totalorder %s23, 0
      %p71 = por %p69, %p70
      %s73 = sadd.s32 %s72, 1
      %p76 = scmp.eq.s32.totalorder %s17, 1
      %p77 = scmp.ne.s32.totalorder %s72, %s74
      %p78 = scmp.eq.s32.totalorder %s17, 0
      %p79 = por %p77, %p78
      %p80 = scmp.ne.s32.totalorder %s72, %s74
      %p81 = scmp.eq.s32.totalorder %s22, 1
      %p82 = por %p80, %p81
      %p83 = scmp.ne.s32.totalorder %s74, %s75
      %p84 = scmp.eq.s32.totalorder %s22, 0
      %p85 = por %p83, %p84
      %p86 = scmp.ne.s32.totalorder %s74, %s75
      %p87 = scmp.eq.s32.totalorder %s23, 1
      %p88 = por %p86, %p87
      %p90 = scmp.ne.s32.totalorder %s75, %s89
      %p91 = scmp.eq.s32.totalorder %s23, 0
      %p92 = por %p90, %p91
      %s94 = sadd.s32 %s93, 1
      %p97 = scmp.eq.s32.totalorder %s17, 1
      %p98 = scmp.ne.s32.totalorder %s93, %s95
      %p99 = scmp.eq.s32.totalorder %s17, 0
      %p100 = por %p98, %p99
      %p101 = scmp.ne.s32.totalorder %s93, %s95
      %p102 = scmp.eq.s32.totalorder %s22, 1
      %p103 = por %p101, %p102
      %p104 = scmp.ne.s32.totalorder %s95, %s96
      %p105 = scmp.eq.s32.totalorder %s22, 0
      %p106 = por %p104, %p105
      %p107 = scmp.ne.s32.totalorder %s95, %s96
      %p108 = scmp.eq.s32.totalorder %s23, 1
      %p109 = por %p107, %p108
      %p111 = scmp.ne.s32.totalorder %s96, %s110
      %p112 = scmp.eq.s32.totalorder %s23, 0
      %p113 = por %p111, %p112
      %s115 = sadd.s32 %s114, 1
      %p118 = scmp.eq.s32.totalorder %s17, 1
      %p119 = scmp.ne.s32.totalorder %s114, %s116
      %p120 = scmp.eq.s32.totalorder %s17, 0
      %p121 = por %p119, %p120
      %p122 = scmp.ne.s32.totalorder %s114, %s116
      %p123 = scmp.eq.s32.totalorder %s22, 1
      %p124 = por %p122, %p123
      %p125 = scmp.ne.s32.totalorder %s116, %s117
      %p126 = scmp.eq.s32.totalorder %s22, 0
      %p127 = por %p125, %p126
      %p128 = scmp.ne.s32.totalorder %s116, %s117
      %p129 = scmp.eq.s32.totalorder %s23, 1
      %p130 = por %p128, %p129
      %p132 = scmp.ne.s32.totalorder %s117, %s131
      %p133 = scmp.eq.s32.totalorder %s23, 0
      %p134 = por %p132, %p133
      %s136 = sadd.s32 %s135, 1
      %p139 = scmp.eq.s32.totalorder %s17, 1
      %p140 = scmp.ne.s32.totalorder %s135, %s137
      %p141 = scmp.eq.s32.totalorder %s17, 0
      %p142 = por %p140, %p141
      %p143 = scmp.ne.s32.totalorder %s135, %s137
      %p144 = scmp.eq.s32.totalorder %s22, 1
      %p145 = por %p143, %p144
      %p146 = scmp.ne.s32.totalorder %s137, %s138
      %p147 = scmp.eq.s32.totalorder %s22, 0
      %p148 = por %p146, %p147
      %p149 = scmp.ne.s32.totalorder %s137, %s138
      %p150 = scmp.eq.s32.totalorder %s23, 1
      %p151 = por %p149, %p150
      %p153 = scmp.ne.s32.totalorder %s138, %s152
      %p154 = scmp.eq.s32.totalorder %s23, 0
      %p155 = por %p153, %p154
      %s157 = sadd.s32 %s156, 1
      %p160 = scmp.eq.s32.totalorder %s17, 1
      %p161 = scmp.ne.s32.totalorder %s156, %s158
      %p162 = scmp.eq.s32.totalorder %s17, 0
      %p163 = por %p161, %p162
      %p164 = scmp.ne.s32.totalorder %s156, %s158
      %p165 = scmp.eq.s32.totalorder %s22, 1
      %p166 = por %p164, %p165
      %p167 = scmp.ne.s32.totalorder %s158, %s159
      %p168 = scmp.eq.s32.totalorder %s22, 0
      %p169 = por %p167, %p168
      %p170 = scmp.ne.s32.totalorder %s158, %s159
      %p171 = scmp.eq.s32.totalorder %s23, 1
      %p172 = por %p170, %p171
      %p174 = scmp.ne.s32.totalorder %s159, %s173
      %p175 = scmp.eq.s32.totalorder %s23, 0
      %p176 = por %p174, %p175
      %s177 = ssub.s32 %s17, %s24
      %p178 = scmp.eq.s32.totalorder %s177, 0
      %s180 = sadd.s32 %s179, 1
      %s181 = scalar_select %p178, %s179, %s180
      %p184 = pneg %p178
      %p185 = scmp.eq.s32.totalorder %s17, 1
      %p186 = por %p184, %p185
      %p187 = scmp.ne.s32.totalorder %s179, %s182
      %p188 = scmp.eq.s32.totalorder %s17, 0
      %p189 = por %p187, %p188
      %p190 = scmp.ne.s32.totalorder %s179, %s182
      %p191 = scmp.eq.s32.totalorder %s22, 1
      %p192 = por %p190, %p191
      %p193 = scmp.ne.s32.totalorder %s182, %s183
      %p194 = scmp.eq.s32.totalorder %s22, 0
      %p195 = por %p193, %p194
      %p196 = scmp.ne.s32.totalorder %s182, %s183
      %p197 = scmp.eq.s32.totalorder %s23, 1
      %p198 = por %p196, %p197
      %p200 = scmp.ne.s32.totalorder %s183, %s199
      %p201 = scmp.eq.s32.totalorder %s23, 0
      %p202 = por %p200, %p201
      %p203 = scmp.le.s32.totalorder 1, %s17
      %p204 = scmp.lt.s32.totalorder %s17, 3
      %p205 = pnand %p203, %p204
      %p206 = pneg %p205
      // Predicated region
      $region9: #{tpu_custom_call.1} parent=5 // pred_check
        _
      $region10: #{tpu_custom_call.1} parent=5 // pred_check_branch
        %208 = sbr.rel (%p205) target = $region12
      $region11: #{tpu_custom_call.1} parent=5 // pred_region
        %s209 = ssub.s32 %s17, 1
        // Predicated region
        $region13: #{tpu_custom_call.1} parent=11 // pred_check
          %p210 = pneg %p64
        $region14: #{tpu_custom_call.1} parent=11 // pred_check_branch
          %212 = sbr.rel (%p210) target = $region16
        $region15: #{tpu_custom_call.1} parent=11 // pred_region
          _
        $region16: #{tpu_custom_call.1} parent=11 // pred_fallthru
          _
        // Predicated region
        $region17: #{tpu_custom_call.1} parent=11 // pred_check
          %p213 = pneg %p85
        $region18: #{tpu_custom_call.1} parent=11 // pred_check_branch
          %215 = sbr.rel (%p213) target = $region20
        $region19: #{tpu_custom_call.1} parent=11 // pred_region
          _
        $region20: #{tpu_custom_call.1} parent=11 // pred_fallthru
          _
        // Predicated region
        $region21: #{tpu_custom_call.1} parent=11 // pred_check
          %p216 = pneg %p106
        $region22: #{tpu_custom_call.1} parent=11 // pred_check_branch
          %218 = sbr.rel (%p216) target = $region24
        $region23: #{tpu_custom_call.1} parent=11 // pred_region
          _
        $region24: #{tpu_custom_call.1} parent=11 // pred_fallthru
          _
        // Predicated region
        $region25: #{tpu_custom_call.1} parent=11 // pred_check
          %p219 = pneg %p127
        $region26: #{tpu_custom_call.1} parent=11 // pred_check_branch
          %221 = sbr.rel (%p219) target = $region28
        $region27: #{tpu_custom_call.1} parent=11 // pred_region
          _
        $region28: #{tpu_custom_call.1} parent=11 // pred_fallthru
          _
        // Predicated region
        $region29: #{tpu_custom_call.1} parent=11 // pred_check
          %p222 = pneg %p148
        $region30: #{tpu_custom_call.1} parent=11 // pred_check_branch
          %224 = sbr.rel (%p222) target = $region32
        $region31: #{tpu_custom_call.1} parent=11 // pred_region
          _
        $region32: #{tpu_custom_call.1} parent=11 // pred_fallthru
          _
        // Predicated region
        $region33: #{tpu_custom_call.1} parent=11 // pred_check
          %p225 = pneg %p169
        $region34: #{tpu_custom_call.1} parent=11 // pred_check_branch
          %227 = sbr.rel (%p225) target = $region36
        $region35: #{tpu_custom_call.1} parent=11 // pred_region
          _
        $region36: #{tpu_custom_call.1} parent=11 // pred_fallthru
          _
      $region12: #{tpu_custom_call.1} parent=5 // pred_fallthru
        _
      %p228 = scmp.lt.s32.totalorder %s17, 2
      // Predicated region
      $region37: #{tpu_custom_call.1} parent=5 // pred_check
        %p229 = pneg %p228
      $region38: #{tpu_custom_call.1} parent=5 // pred_check_branch
        %231 = sbr.rel (%p229) target = $region40
      $region39: #{tpu_custom_call.1} parent=5 // pred_region
        // Predicated region
        $region41: #{tpu_custom_call.1} parent=39 // pred_check
          %p232 = pneg %p37
        $region42: #{tpu_custom_call.1} parent=39 // pred_check_branch
          %234 = sbr.rel (%p232) target = $region44
        $region43: #{tpu_custom_call.1} parent=39 // pred_region
          %p235 = scmp.lt.s32.totalorder %s17, 1
          %s236 = scalar_select %p235, %s17, 1
          %s237 = smul.addr %s236, 2
          %s238 = scalar_lea.vmem %s0, %s237
        $region44: #{tpu_custom_call.1} parent=39 // pred_fallthru
          _
      $region40: #{tpu_custom_call.1} parent=5 // pred_fallthru
        _
      %p239 = scmp.le.s32.totalorder 1, %s17
      %p240 = scmp.lt.s32.totalorder %s17, 3
      %p241 = pnand %p239, %p240
      %p242 = pneg %p241
      // Predicated region
      $region45: #{tpu_custom_call.1} parent=5 // pred_check
        _
      $region46: #{tpu_custom_call.1} parent=5 // pred_check_branch
        %244 = sbr.rel (%p241) target = $region48
      $region47: #{tpu_custom_call.1} parent=5 // pred_region
        %s245 = ssub.s32 %s17, 1
        %p246 = scmp.lt.s32.totalorder %s22, 1
        %s247 = scalar_select %p246, %s22, 1
        %s248 = smul.addr %s247, 2
        %s249 = scalar_lea.vmem %s0, %s248
        %p250 = pneg %p43
        %p251 = pneg %p40
        %p252 = pneg %p64
        %p253 = pneg %p61
        %p254 = pneg %p85
        %p255 = pneg %p82
        %p256 = pneg %p106
        %p257 = pneg %p103
        %p258 = pneg %p127
        %p259 = pneg %p124
        %p260 = pneg %p148
        %p261 = pneg %p145
        %p262 = pneg %p169
        %p263 = pneg %p166
        %p264 = pneg %p195
        %p265 = pneg %p192
        %s266 = sand.u32 %s182, 1
        %s267 = scalar_lea.sflag [#allocation4], %s266
        %s268 = sand.u32 %s182, 1
        %s269 = scalar_lea.vmem [#allocation3], %s268
        %p270 = scmp.lt.s32.totalorder %s22, 1
        %s271 = scalar_select %p270, %s22, 1
        %s272 = smul.addr %s271, 2
        %s273 = scalar_lea.vmem %s0, %s272
        %v274 = vld [vmem:[%s2] sm:$0xff]
        %v275 = vld [vmem:[%s2 + $0x8] sm:$0xff]
        %v276 = vld [vmem:[%s2 + $0x10] sm:$0xff]
        %v277 = vld [vmem:[%s2 + $0x18] sm:$0xff]
        %v278 = vld [vmem:[%s2 + $0x20] sm:$0xff]
        %v279 = vld [vmem:[%s2 + $0x28] sm:$0xff]
        %v280 = vld [vmem:[%s2 + $0x30] sm:$0xff]
        %v281 = vld [vmem:[%s2 + $0x38] sm:$0xff]
        %v282 = vld [vmem:[%s2 + $0x40] sm:$0xff]
        %v283 = vld [vmem:[%s2 + $0x48] sm:$0xff]
        %v284 = vld [vmem:[%s2 + $0x50] sm:$0xff]
        %v285 = vld [vmem:[%s2 + $0x58] sm:$0xff]
        %v286 = vld [vmem:[%s2 + $0x60] sm:$0xff]
        %v287 = vld [vmem:[%s2 + $0x68] sm:$0xff]
        %v288 = vld [vmem:[%s2 + $0x70] sm:$0xff]
        %v289 = vld [vmem:[%s2 + $0x78] sm:$0xff]
        %v290 = vld [vmem:[%s273] sm:$0x3]
        %v291 = vld [vmem:[%s1] sm:$0xff]
        %v292 = vld [vmem:[%s1 + $0x8] sm:$0xff]
        %v293 = vld [vmem:[%s1 + $0x10] sm:$0xff]
        %v294 = vld [vmem:[%s1 + $0x18] sm:$0xff]
        %v295 = vld [vmem:[%s1 + $0x20] sm:$0xff]
        %v296 = vld [vmem:[%s1 + $0x28] sm:$0xff]
        %v297 = vld [vmem:[%s1 + $0x30] sm:$0xff]
        %v298 = vld [vmem:[%s1 + $0x38] sm:$0xff]
        %v299 = vld [vmem:[%s1 + $0x40] sm:$0xff]
        %v300 = vld [vmem:[%s1 + $0x48] sm:$0xff]
        %v301 = vld [vmem:[%s1 + $0x50] sm:$0xff]
        %v302 = vld [vmem:[%s1 + $0x58] sm:$0xff]
        %v303 = vld [vmem:[%s1 + $0x60] sm:$0xff]
        %v304 = vld [vmem:[%s1 + $0x68] sm:$0xff]
        %v305 = vld [vmem:[%s1 + $0x70] sm:$0xff]
        %v306 = vld [vmem:[%s1 + $0x78] sm:$0xff]
        %308 = vset.pattern.permute.xlu0 0
        %309 = vperm.xlu0 %308, %v291
        %v310 = vpop.permute.xlu0 %309
        %313 = vset.pattern.permute.xlu0 0
        %314 = vperm.xlu0 %313, %v292
        %v315 = vpop.permute.xlu0 %314
        %318 = vset.pattern.permute.xlu0 0
        %319 = vperm.xlu0 %318, %v293
        %v320 = vpop.permute.xlu0 %319
        %323 = vset.pattern.permute.xlu0 0
        %324 = vperm.xlu0 %323, %v294
        %v325 = vpop.permute.xlu0 %324
        %328 = vset.pattern.permute.xlu0 0
        %329 = vperm.xlu0 %328, %v295
        %v330 = vpop.permute.xlu0 %329
        %333 = vset.pattern.permute.xlu0 0
        %334 = vperm.xlu0 %333, %v296
        %v335 = vpop.permute.xlu0 %334
        %338 = vset.pattern.permute.xlu0 0
        %339 = vperm.xlu0 %338, %v297
        %v340 = vpop.permute.xlu0 %339
        %343 = vset.pattern.permute.xlu0 0
        %344 = vperm.xlu0 %343, %v298
        %v345 = vpop.permute.xlu0 %344
        %348 = vset.pattern.permute.xlu0 0
        %349 = vperm.xlu0 %348, %v299
        %v350 = vpop.permute.xlu0 %349
        %353 = vset.pattern.permute.xlu0 0
        %354 = vperm.xlu0 %353, %v300
        %v355 = vpop.permute.xlu0 %354
        %358 = vset.pattern.permute.xlu0 0
        %359 = vperm.xlu0 %358, %v301
        %v360 = vpop.permute.xlu0 %359
        %363 = vset.pattern.permute.xlu0 0
        %364 = vperm.xlu0 %363, %v302
        %v365 = vpop.permute.xlu0 %364
        %368 = vset.pattern.permute.xlu0 0
        %369 = vperm.xlu0 %368, %v303
        %v370 = vpop.permute.xlu0 %369
        %373 = vset.pattern.permute.xlu0 0
        %374 = vperm.xlu0 %373, %v304
        %v375 = vpop.permute.xlu0 %374
        %378 = vset.pattern.permute.xlu0 0
        %379 = vperm.xlu0 %378, %v305
        %v380 = vpop.permute.xlu0 %379
        %383 = vset.pattern.permute.xlu0 0
        %384 = vperm.xlu0 %383, %v306
        %v385 = vpop.permute.xlu0 %384
        %v387 = vperm.slane %v290, 0
        %v388 = vmul.f32 %v310, %v387
        %v389 = vmul.f32 %v315, %v387
        %v390 = vmul.f32 %v320, %v387
        %v391 = vmul.f32 %v325, %v387
        %v392 = vmul.f32 %v330, %v387
        %v393 = vmul.f32 %v335, %v387
        %v394 = vmul.f32 %v340, %v387
        %v395 = vmul.f32 %v345, %v387
        %v396 = vmul.f32 %v350, %v387
        %v397 = vmul.f32 %v355, %v387
        %v398 = vmul.f32 %v360, %v387
        %v399 = vmul.f32 %v365, %v387
        %v400 = vmul.f32 %v370, %v387
        %v401 = vmul.f32 %v375, %v387
        %v402 = vmul.f32 %v380, %v387
        %v403 = vmul.f32 %v385, %v387
        %405 = vset.pattern.permute.xlu0 0
        %406 = vperm.xlu0 %405, %v274
        %v407 = vpop.permute.xlu0 %406
        %410 = vset.pattern.permute.xlu0 0
        %411 = vperm.xlu0 %410, %v275
        %v412 = vpop.permute.xlu0 %411
        %415 = vset.pattern.permute.xlu0 0
        %416 = vperm.xlu0 %415, %v276
        %v417 = vpop.permute.xlu0 %416
        %420 = vset.pattern.permute.xlu0 0
        %421 = vperm.xlu0 %420, %v277
        %v422 = vpop.permute.xlu0 %421
        %425 = vset.pattern.permute.xlu0 0
        %426 = vperm.xlu0 %425, %v278
        %v427 = vpop.permute.xlu0 %426
        %430 = vset.pattern.permute.xlu0 0
        %431 = vperm.xlu0 %430, %v279
        %v432 = vpop.permute.xlu0 %431
        %435 = vset.pattern.permute.xlu0 0
        %436 = vperm.xlu0 %435, %v280
        %v437 = vpop.permute.xlu0 %436
        %440 = vset.pattern.permute.xlu0 0
        %441 = vperm.xlu0 %440, %v281
        %v442 = vpop.permute.xlu0 %441
        %445 = vset.pattern.permute.xlu0 0
        %446 = vperm.xlu0 %445, %v282
        %v447 = vpop.permute.xlu0 %446
        %450 = vset.pattern.permute.xlu0 0
        %451 = vperm.xlu0 %450, %v283
        %v452 = vpop.permute.xlu0 %451
        %455 = vset.pattern.permute.xlu0 0
        %456 = vperm.xlu0 %455, %v284
        %v457 = vpop.permute.xlu0 %456
        %460 = vset.pattern.permute.xlu0 0
        %461 = vperm.xlu0 %460, %v285
        %v462 = vpop.permute.xlu0 %461
        %465 = vset.pattern.permute.xlu0 0
        %466 = vperm.xlu0 %465, %v286
        %v467 = vpop.permute.xlu0 %466
        %470 = vset.pattern.permute.xlu0 0
        %471 = vperm.xlu0 %470, %v287
        %v472 = vpop.permute.xlu0 %471
        %475 = vset.pattern.permute.xlu0 0
        %476 = vperm.xlu0 %475, %v288
        %v477 = vpop.permute.xlu0 %476
        %480 = vset.pattern.permute.xlu0 0
        %481 = vperm.xlu0 %480, %v289
        %v482 = vpop.permute.xlu0 %481
        %v484 = vadd.f32 %v407, %v388
        %v485 = vadd.f32 %v412, %v389
        %v486 = vadd.f32 %v417, %v390
        %v487 = vadd.f32 %v422, %v391
        %v488 = vadd.f32 %v427, %v392
        %v489 = vadd.f32 %v432, %v393
        %v490 = vadd.f32 %v437, %v394
        %v491 = vadd.f32 %v442, %v395
        %v492 = vadd.f32 %v447, %v396
        %v493 = vadd.f32 %v452, %v397
        %v494 = vadd.f32 %v457, %v398
        %v495 = vadd.f32 %v462, %v399
        %v496 = vadd.f32 %v467, %v400
        %v497 = vadd.f32 %v472, %v401
        %v498 = vadd.f32 %v477, %v402
        %v499 = vadd.f32 %v482, %v403
        %500 = vset.pattern.permute.xlu0 1
        %501 = vperm.xlu0 %500, %v291
        %v502 = vpop.permute.xlu0 %501
        %504 = vset.pattern.permute.xlu0 1
        %505 = vperm.xlu0 %504, %v292
        %v506 = vpop.permute.xlu0 %505
        %508 = vset.pattern.permute.xlu0 1
        %509 = vperm.xlu0 %508, %v293
        %v510 = vpop.permute.xlu0 %509
        %512 = vset.pattern.permute.xlu0 1
        %513 = vperm.xlu0 %512, %v294
        %v514 = vpop.permute.xlu0 %513
        %516 = vset.pattern.permute.xlu0 1
        %517 = vperm.xlu0 %516, %v295
        %v518 = vpop.permute.xlu0 %517
        %520 = vset.pattern.permute.xlu0 1
        %521 = vperm.xlu0 %520, %v296
        %v522 = vpop.permute.xlu0 %521
        %524 = vset.pattern.permute.xlu0 1
        %525 = vperm.xlu0 %524, %v297
        %v526 = vpop.permute.xlu0 %525
        %528 = vset.pattern.permute.xlu0 1
        %529 = vperm.xlu0 %528, %v298
        %v530 = vpop.permute.xlu0 %529
        %532 = vset.pattern.permute.xlu0 1
        %533 = vperm.xlu0 %532, %v299
        %v534 = vpop.permute.xlu0 %533
        %536 = vset.pattern.permute.xlu0 1
        %537 = vperm.xlu0 %536, %v300
        %v538 = vpop.permute.xlu0 %537
        %540 = vset.pattern.permute.xlu0 1
        %541 = vperm.xlu0 %540, %v301
        %v542 = vpop.permute.xlu0 %541
        %544 = vset.pattern.permute.xlu0 1
        %545 = vperm.xlu0 %544, %v302
        %v546 = vpop.permute.xlu0 %545
        %548 = vset.pattern.permute.xlu0 1
        %549 = vperm.xlu0 %548, %v303
        %v550 = vpop.permute.xlu0 %549
        %552 = vset.pattern.permute.xlu0 1
        %553 = vperm.xlu0 %552, %v304
        %v554 = vpop.permute.xlu0 %553
        %556 = vset.pattern.permute.xlu0 1
        %557 = vperm.xlu0 %556, %v305
        %v558 = vpop.permute.xlu0 %557
        %560 = vset.pattern.permute.xlu0 1
        %561 = vperm.xlu0 %560, %v306
        %v562 = vpop.permute.xlu0 %561
        %v564 = vperm.slane %v290, 1
        %v565 = vmul.f32 %v502, %v564
        %v566 = vmul.f32 %v506, %v564
        %v567 = vmul.f32 %v510, %v564
        %v568 = vmul.f32 %v514, %v564
        %v569 = vmul.f32 %v518, %v564
        %v570 = vmul.f32 %v522, %v564
        %v571 = vmul.f32 %v526, %v564
        %v572 = vmul.f32 %v530, %v564
        %v573 = vmul.f32 %v534, %v564
        %v574 = vmul.f32 %v538, %v564
        %v575 = vmul.f32 %v542, %v564
        %v576 = vmul.f32 %v546, %v564
        %v577 = vmul.f32 %v550, %v564
        %v578 = vmul.f32 %v554, %v564
        %v579 = vmul.f32 %v558, %v564
        %v580 = vmul.f32 %v562, %v564
        %v581 = vadd.f32 %v484, %v565
        %v582 = vadd.f32 %v485, %v566
        %v583 = vadd.f32 %v486, %v567
        %v584 = vadd.f32 %v487, %v568
        %v585 = vadd.f32 %v488, %v569
        %v586 = vadd.f32 %v489, %v570
        %v587 = vadd.f32 %v490, %v571
        %v588 = vadd.f32 %v491, %v572
        %v589 = vadd.f32 %v492, %v573
        %v590 = vadd.f32 %v493, %v574
        %v591 = vadd.f32 %v494, %v575
        %v592 = vadd.f32 %v495, %v576
        %v593 = vadd.f32 %v496, %v577
        %v594 = vadd.f32 %v497, %v578
        %v595 = vadd.f32 %v498, %v579
        %v596 = vadd.f32 %v499, %v580
        %v597 = vmax.f32 %v581, 0.0
        %v598 = vmax.f32 %v582, 0.0
        %v599 = vmax.f32 %v583, 0.0
        %v600 = vmax.f32 %v584, 0.0
        %v601 = vmax.f32 %v585, 0.0
        %v602 = vmax.f32 %v586, 0.0
        %v603 = vmax.f32 %v587, 0.0
        %v604 = vmax.f32 %v588, 0.0
        %v605 = vmax.f32 %v589, 0.0
        %v606 = vmax.f32 %v590, 0.0
        %v607 = vmax.f32 %v591, 0.0
        %v608 = vmax.f32 %v592, 0.0
        %v609 = vmax.f32 %v593, 0.0
        %v610 = vmax.f32 %v594, 0.0
        %v611 = vmax.f32 %v595, 0.0
        %v612 = vmax.f32 %v596, 0.0
        %v613 = vld [vmem:[%s3] sm:$0xff]
        %v614 = vld [vmem:[%s3 + $0x8] sm:$0xff]
        %v615 = vld [vmem:[%s3 + $0x10] sm:$0xff]
        %v616 = vld [vmem:[%s3 + $0x18] sm:$0xff]
        %v617 = vld [vmem:[%s3 + $0x20] sm:$0xff]
        %v618 = vld [vmem:[%s3 + $0x28] sm:$0xff]
        %v619 = vld [vmem:[%s3 + $0x30] sm:$0xff]
        %v620 = vld [vmem:[%s3 + $0x38] sm:$0xff]
        %v621 = vld [vmem:[%s3 + $0x40] sm:$0xff]
        %v622 = vld [vmem:[%s3 + $0x48] sm:$0xff]
        %v623 = vld [vmem:[%s3 + $0x50] sm:$0xff]
        %v624 = vld [vmem:[%s3 + $0x58] sm:$0xff]
        %v625 = vld [vmem:[%s3 + $0x60] sm:$0xff]
        %v626 = vld [vmem:[%s3 + $0x68] sm:$0xff]
        %v627 = vld [vmem:[%s3 + $0x70] sm:$0xff]
        %v628 = vld [vmem:[%s3 + $0x78] sm:$0xff]
        %v629 = vld [vmem:[%s4] sm:$0xff]
        %v630 = vld [vmem:[%s4 + $0x8] sm:$0xff]
        %v631 = vld [vmem:[%s4 + $0x10] sm:$0xff]
        %v632 = vld [vmem:[%s4 + $0x18] sm:$0xff]
        %v633 = vld [vmem:[%s4 + $0x20] sm:$0xff]
        %v634 = vld [vmem:[%s4 + $0x28] sm:$0xff]
        %v635 = vld [vmem:[%s4 + $0x30] sm:$0xff]
        %v636 = vld [vmem:[%s4 + $0x38] sm:$0xff]
        %v637 = vld [vmem:[%s4 + $0x40] sm:$0xff]
        %v638 = vld [vmem:[%s4 + $0x48] sm:$0xff]
        %v639 = vld [vmem:[%s4 + $0x50] sm:$0xff]
        %v640 = vld [vmem:[%s4 + $0x58] sm:$0xff]
        %v641 = vld [vmem:[%s4 + $0x60] sm:$0xff]
        %v642 = vld [vmem:[%s4 + $0x68] sm:$0xff]
        %v643 = vld [vmem:[%s4 + $0x70] sm:$0xff]
        %v644 = vld [vmem:[%s4 + $0x78] sm:$0xff]
        %646 = vset.pattern.permute.xlu0 0
        %647 = vperm.xlu0 %646, %v629
        %v648 = vpop.permute.xlu0 %647
        %651 = vset.pattern.permute.xlu0 0
        %652 = vperm.xlu0 %651, %v630
        %v653 = vpop.permute.xlu0 %652
        %656 = vset.pattern.permute.xlu0 0
        %657 = vperm.xlu0 %656, %v631
        %v658 = vpop.permute.xlu0 %657
        %661 = vset.pattern.permute.xlu0 0
        %662 = vperm.xlu0 %661, %v632
        %v663 = vpop.permute.xlu0 %662
        %666 = vset.pattern.permute.xlu0 0
        %667 = vperm.xlu0 %666, %v633
        %v668 = vpop.permute.xlu0 %667
        %671 = vset.pattern.permute.xlu0 0
        %672 = vperm.xlu0 %671, %v634
        %v673 = vpop.permute.xlu0 %672
        %676 = vset.pattern.permute.xlu0 0
        %677 = vperm.xlu0 %676, %v635
        %v678 = vpop.permute.xlu0 %677
        %681 = vset.pattern.permute.xlu0 0
        %682 = vperm.xlu0 %681, %v636
        %v683 = vpop.permute.xlu0 %682
        %686 = vset.pattern.permute.xlu0 0
        %687 = vperm.xlu0 %686, %v637
        %v688 = vpop.permute.xlu0 %687
        %691 = vset.pattern.permute.xlu0 0
        %692 = vperm.xlu0 %691, %v638
        %v693 = vpop.permute.xlu0 %692
        %696 = vset.pattern.permute.xlu0 0
        %697 = vperm.xlu0 %696, %v639
        %v698 = vpop.permute.xlu0 %697
        %701 = vset.pattern.permute.xlu0 0
        %702 = vperm.xlu0 %701, %v640
        %v703 = vpop.permute.xlu0 %702
        %706 = vset.pattern.permute.xlu0 0
        %707 = vperm.xlu0 %706, %v641
        %v708 = vpop.permute.xlu0 %707
        %711 = vset.pattern.permute.xlu0 0
        %712 = vperm.xlu0 %711, %v642
        %v713 = vpop.permute.xlu0 %712
        %716 = vset.pattern.permute.xlu0 0
        %717 = vperm.xlu0 %716, %v643
        %v718 = vpop.permute.xlu0 %717
        %721 = vset.pattern.permute.xlu0 0
        %722 = vperm.xlu0 %721, %v644
        %v723 = vpop.permute.xlu0 %722
        %725 = vmatpush.msra.mxu0 %v612
        %726 = vmatpush.msra.mxu0 %v611
        %727 = vmatpush.msra.mxu0 %v610
        %728 = vmatpush.msra.mxu0 %v609
        %729 = vmatpush.msra.mxu0 %v608
        %730 = vmatpush.msra.mxu0 %v607
        %731 = vmatpush.msra.mxu0 %v606
        %732 = vmatpush.msra.mxu0 %v605
        %733 = vmatpush.msra.mxu0 %v604
        %734 = vmatpush.msra.mxu0 %v603
        %735 = vmatpush.msra.mxu0 %v602
        %736 = vmatpush.msra.mxu0 %v601
        %737 = vmatpush.msra.mxu0 %v600
        %738 = vmatpush.msra.mxu0 %v599
        %739 = vmatpush.msra.mxu0 %v598
        %740 = vmatpush.msra.mxu0 %v597
        %741 = vmatmul.f32.gmra.mxu0 %v613
        %v742 = vpop.f32.mrf.mxu0
        %v743 = vadd.f32 %v648, %v742
        %744 = vmatmul.f32.gmra.mxu0 %v614
        %v745 = vpop.f32.mrf.mxu0
        %v746 = vadd.f32 %v653, %v745
        %747 = vmatmul.f32.gmra.mxu0 %v615
        %v748 = vpop.f32.mrf.mxu0
        %v749 = vadd.f32 %v658, %v748
        %750 = vmatmul.f32.gmra.mxu0 %v616
        %v751 = vpop.f32.mrf.mxu0
        %v752 = vadd.f32 %v663, %v751
        %753 = vmatmul.f32.gmra.mxu0 %v617
        %v754 = vpop.f32.mrf.mxu0
        %v755 = vadd.f32 %v668, %v754
        %756 = vmatmul.f32.gmra.mxu0 %v618
        %v757 = vpop.f32.mrf.mxu0
        %v758 = vadd.f32 %v673, %v757
        %759 = vmatmul.f32.gmra.mxu0 %v619
        %v760 = vpop.f32.mrf.mxu0
        %v761 = vadd.f32 %v678, %v760
        %762 = vmatmul.f32.gmra.mxu0 %v620
        %v763 = vpop.f32.mrf.mxu0
        %v764 = vadd.f32 %v683, %v763
        %765 = vmatmul.f32.gmra.mxu0 %v621
        %v766 = vpop.f32.mrf.mxu0
        %v767 = vadd.f32 %v688, %v766
        %768 = vmatmul.f32.gmra.mxu0 %v622
        %v769 = vpop.f32.mrf.mxu0
        %v770 = vadd.f32 %v693, %v769
        %771 = vmatmul.f32.gmra.mxu0 %v623
        %v772 = vpop.f32.mrf.mxu0
        %v773 = vadd.f32 %v698, %v772
        %774 = vmatmul.f32.gmra.mxu0 %v624
        %v775 = vpop.f32.mrf.mxu0
        %v776 = vadd.f32 %v703, %v775
        %777 = vmatmul.f32.gmra.mxu0 %v625
        %v778 = vpop.f32.mrf.mxu0
        %v779 = vadd.f32 %v708, %v778
        %780 = vmatmul.f32.gmra.mxu0 %v626
        %v781 = vpop.f32.mrf.mxu0
        %v782 = vadd.f32 %v713, %v781
        %783 = vmatmul.f32.gmra.mxu0 %v627
        %v784 = vpop.f32.mrf.mxu0
        %v785 = vadd.f32 %v718, %v784
        %786 = vmatmul.f32.gmra.mxu0 %v628
        %v787 = vpop.f32.mrf.mxu0
        %v788 = vadd.f32 %v723, %v787
        %789 = vdwg.mxu0
        %v790 = vmax.f32 %v743, 0.0
        %v791 = vmax.f32 %v746, 0.0
        %v792 = vmax.f32 %v749, 0.0
        %v793 = vmax.f32 %v752, 0.0
        %v794 = vmax.f32 %v755, 0.0
        %v795 = vmax.f32 %v758, 0.0
        %v796 = vmax.f32 %v761, 0.0
        %v797 = vmax.f32 %v764, 0.0
        %v798 = vmax.f32 %v767, 0.0
        %v799 = vmax.f32 %v770, 0.0
        %v800 = vmax.f32 %v773, 0.0
        %v801 = vmax.f32 %v776, 0.0
        %v802 = vmax.f32 %v779, 0.0
        %v803 = vmax.f32 %v782, 0.0
        %v804 = vmax.f32 %v785, 0.0
        %v805 = vmax.f32 %v788, 0.0
        %v806 = vld [vmem:[%s5] sm:$0xff]
        %v807 = vld [vmem:[%s5 + $0x8] sm:$0xff]
        %v808 = vld [vmem:[%s5 + $0x10] sm:$0xff]
        %v809 = vld [vmem:[%s5 + $0x18] sm:$0xff]
        %v810 = vld [vmem:[%s5 + $0x20] sm:$0xff]
        %v811 = vld [vmem:[%s5 + $0x28] sm:$0xff]
        %v812 = vld [vmem:[%s5 + $0x30] sm:$0xff]
        %v813 = vld [vmem:[%s5 + $0x38] sm:$0xff]
        %v814 = vld [vmem:[%s5 + $0x40] sm:$0xff]
        %v815 = vld [vmem:[%s5 + $0x48] sm:$0xff]
        %v816 = vld [vmem:[%s5 + $0x50] sm:$0xff]
        %v817 = vld [vmem:[%s5 + $0x58] sm:$0xff]
        %v818 = vld [vmem:[%s5 + $0x60] sm:$0xff]
        %v819 = vld [vmem:[%s5 + $0x68] sm:$0xff]
        %v820 = vld [vmem:[%s5 + $0x70] sm:$0xff]
        %v821 = vld [vmem:[%s5 + $0x78] sm:$0xff]
        %823 = vset.pattern.permute.xlu0 0
        %824 = vperm.xlu0 %823, %v806
        %v825 = vpop.permute.xlu0 %824
        %828 = vset.pattern.permute.xlu0 0
        %829 = vperm.xlu0 %828, %v807
        %v830 = vpop.permute.xlu0 %829
        %833 = vset.pattern.permute.xlu0 0
        %834 = vperm.xlu0 %833, %v808
        %v835 = vpop.permute.xlu0 %834
        %838 = vset.pattern.permute.xlu0 0
        %839 = vperm.xlu0 %838, %v809
        %v840 = vpop.permute.xlu0 %839
        %843 = vset.pattern.permute.xlu0 0
        %844 = vperm.xlu0 %843, %v810
        %v845 = vpop.permute.xlu0 %844
        %848 = vset.pattern.permute.xlu0 0
        %849 = vperm.xlu0 %848, %v811
        %v850 = vpop.permute.xlu0 %849
        %853 = vset.pattern.permute.xlu0 0
        %854 = vperm.xlu0 %853, %v812
        %v855 = vpop.permute.xlu0 %854
        %858 = vset.pattern.permute.xlu0 0
        %859 = vperm.xlu0 %858, %v813
        %v860 = vpop.permute.xlu0 %859
        %863 = vset.pattern.permute.xlu0 0
        %864 = vperm.xlu0 %863, %v814
        %v865 = vpop.permute.xlu0 %864
        %868 = vset.pattern.permute.xlu0 0
        %869 = vperm.xlu0 %868, %v815
        %v870 = vpop.permute.xlu0 %869
        %873 = vset.pattern.permute.xlu0 0
        %874 = vperm.xlu0 %873, %v816
        %v875 = vpop.permute.xlu0 %874
        %878 = vset.pattern.permute.xlu0 0
        %879 = vperm.xlu0 %878, %v817
        %v880 = vpop.permute.xlu0 %879
        %883 = vset.pattern.permute.xlu0 0
        %884 = vperm.xlu0 %883, %v818
        %v885 = vpop.permute.xlu0 %884
        %888 = vset.pattern.permute.xlu0 0
        %889 = vperm.xlu0 %888, %v819
        %v890 = vpop.permute.xlu0 %889
        %893 = vset.pattern.permute.xlu0 0
        %894 = vperm.xlu0 %893, %v820
        %v895 = vpop.permute.xlu0 %894
        %898 = vset.pattern.permute.xlu0 0
        %899 = vperm.xlu0 %898, %v821
        %v900 = vpop.permute.xlu0 %899
        %v902 = vmul.f32 %v825, %v790
        %v903 = vmul.f32 %v830, %v791
        %v904 = vmul.f32 %v835, %v792
        %v905 = vmul.f32 %v840, %v793
        %v906 = vmul.f32 %v845, %v794
        %v907 = vmul.f32 %v850, %v795
        %v908 = vmul.f32 %v855, %v796
        %v909 = vmul.f32 %v860, %v797
        %v910 = vmul.f32 %v865, %v798
        %v911 = vmul.f32 %v870, %v799
        %v912 = vmul.f32 %v875, %v800
        %v913 = vmul.f32 %v880, %v801
        %v914 = vmul.f32 %v885, %v802
        %v915 = vmul.f32 %v890, %v803
        %v916 = vmul.f32 %v895, %v804
        %v917 = vmul.f32 %v900, %v805
        %v918 = vadd.f32 %v902, %v903
        %v919 = vadd.f32 %v918, %v904
        %v920 = vadd.f32 %v919, %v905
        %v921 = vadd.f32 %v920, %v906
        %v922 = vadd.f32 %v921, %v907
        %v923 = vadd.f32 %v922, %v908
        %v924 = vadd.f32 %v923, %v909
        %v925 = vadd.f32 %v924, %v910
        %v926 = vadd.f32 %v925, %v911
        %v927 = vadd.f32 %v926, %v912
        %v928 = vadd.f32 %v927, %v913
        %v929 = vadd.f32 %v928, %v914
        %v930 = vadd.f32 %v929, %v915
        %v931 = vadd.f32 %v930, %v916
        %v932 = vadd.f32 %v931, %v917
        %v933 = vrot.slane %v932, 4
        %v934 = vadd.f32 %v932, %v933
        %v935 = vrot.slane %v934, 2
        %v936 = vadd.f32 %v934, %v935
        %v937 = vrot.slane %v936, 1
        %v938 = vadd.f32 %v936, %v937
        %s939 = sld [smem:[#allocation2]]
        %v940 = vstv %s939
        %v941 = vadd.f32 %v938, %v940
        %942 = vst [vmem:[%s269] sm:$0x1] %v941
        %s943 = sand.u32 %s182, 1
        %s944 = scalar_lea.sflag [#allocation4], %s943
        %s945 = sand.u32 %s182, 1
        %s946 = scalar_lea.vmem [#allocation3], %s945
        // Predicated region
        $region49: #{tpu_custom_call.1} parent=47 // pred_check
          %p947 = pneg %p192
        $region50: #{tpu_custom_call.1} parent=47 // pred_check_branch
          %949 = sbr.rel (%p947) target = $region52
        $region51: #{tpu_custom_call.1} parent=47 // pred_region
          %951 = vsyncadd %s944, 0
          %s952 = scalar_lea.hbm %s7, %s22
          %s954 = sshll.u32 %s946, 4
          %s955 = int_to_ptr.vmem [resolvable:$true] %s954
          %s956 = sshll.u32 %s952, 4
          %s957 = int_to_ptr.hbm [resolvable:$true] %s956
          %959 = dma.vmem_to_hbm [thread:$0]  %s955, 16, %s957, %s944
        $region52: #{tpu_custom_call.1} parent=47 // pred_fallthru
          _
      $region48: #{tpu_custom_call.1} parent=5 // pred_fallthru
        _
      %p960 = scmp.le.s32.totalorder 2, %s17
      // Predicated region
      $region53: #{tpu_custom_call.1} parent=5 // pred_check
        %p961 = pneg %p960
      $region54: #{tpu_custom_call.1} parent=5 // pred_check_branch
        %963 = sbr.rel (%p961) target = $region56
      $region55: #{tpu_custom_call.1} parent=5 // pred_region
        %s964 = ssub.s32 %s17, 2
        // Predicated region
        $region57: #{tpu_custom_call.1} parent=55 // pred_check
          %p965 = pneg %p198
        $region58: #{tpu_custom_call.1} parent=55 // pred_check_branch
          %967 = sbr.rel (%p965) target = $region60
        $region59: #{tpu_custom_call.1} parent=55 // pred_region
          %s968 = sand.u32 %s183, 1
          %s969 = scalar_lea.sflag [#allocation4], %s968
          %s970 = sand.u32 %s183, 1
          %s971 = scalar_lea.vmem [#allocation3], %s970
          %973 = dma.done %s969, 16
        $region60: #{tpu_custom_call.1} parent=55 // pred_fallthru
          _
      $region56: #{tpu_custom_call.1} parent=5 // pred_fallthru
        _
    $region6: #{tpu_custom_call.1} parent=1 // loop_footer
      %s21 = sadd.s32 1, %s17
    $region7: #{tpu_custom_call.1} parent=1 // loop_footer_branch
      %16 = sbr.rel target = $region3
    $region8: #{tpu_custom_call.1} parent=1 // loop_exit
      _
    %974 = vsyncpa [#allocation4], 1
    %s975 = scalar_lea.sflag [#allocation4], 1
    %976 = vsyncpa %s975, 1

</llo_original>
